<compile_context>
chip_gen: v6e
topology: v6e:2x2x1
jax: 0.10.0
libtpu: 0.0.40
codegen_flags: <defaults>
</compile_context>

<pallas_src>
import functools

import jax
import jax.numpy as jnp
import numpy as np
from jax import lax
from jax.experimental import pallas as pl
from jax.experimental.pallas import tpu as pltpu

_VMEM_LIMIT = 48 * 1024 * 1024  # explicit scoped-VMEM limit (headroom under v7x 64 MiB)


def _ipow(t, p):
    # integer power via repeated multiplies (VALU) instead of exp/log (EUP)
    out = t
    for _ in range(p - 1):
        out = out * t
    return out


def _pick_n_tile(n, max_tile):
    """Largest divisor of n that is <= max_tile and a multiple of 8 (else n)."""
    if n <= max_tile:
        return n
    for t in range(max_tile, 7, -8):
        if t % 8 == 0 and n % t == 0:
            return t
    return n


# --------------------------------------------------------------------------
# Kernel A: fused qkv projection + focused feature map, tiled over N.
# Accumulates kv = (k^T v) and sum(k) into per-batch output-resident blocks;
# at the last N-tile the kv block is masked block-diagonally (1/N folded into
# the hoisted mask) and sum(k) is turned into mean(k).
# Outputs: q_focus (bf16), v (bf16), kv (f32), k_mean (f32).
# --------------------------------------------------------------------------
def _qkv_focus_kernel(x_ref, wqkv_ref, pos_ref, iscale_ref, maskn_ref,
                      qf_ref, v_ref, kv_ref, kmean_ref,
                      *, focusing_factor, inv_n):
    i = pl.program_id(1)
    n_tiles = pl.num_programs(1)
    C = x_ref.shape[2]

    # Fused projection: one MXU matmul, bf16 operands, f32 accumulation.
    x = x_ref[0].astype(jnp.bfloat16)                                  # (tn, C)
    qkv = jnp.dot(x, wqkv_ref[...], preferred_element_type=jnp.float32)  # (tn, 3C)
    q = qkv[:, :C]
    k = qkv[:, C:2 * C] + pos_ref[...].astype(jnp.float32)
    v = qkv[:, 2 * C:]

    inv_scale = iscale_ref[...]                                        # (1, C) = 1/softplus(scale)

    def focus(t):
        t = jnp.maximum(t, 0.0) + 1e-6                                 # ReLU + eps
        t = t * inv_scale
        nrm2 = jnp.sum(t * t, axis=-1, keepdims=True)                  # ||t||^2
        if float(focusing_factor) == int(focusing_factor) and int(focusing_factor) >= 1:
            tp = _ipow(t, int(focusing_factor))
        else:
            tp = t ** focusing_factor
        nrm2_p = jnp.sum(tp * tp, axis=-1, keepdims=True)              # ||t^f||^2
        return tp * (jnp.sqrt(nrm2) * lax.rsqrt(nrm2_p))

    q = focus(q)
    k = focus(k)

    # bf16 intermediates to HBM (halves traffic vs f32).
    qf_ref[0] = q.astype(jnp.bfloat16)
    v_ref[0] = v.astype(jnp.bfloat16)

    # Per-batch accumulators (output blocks resident across the "arbitrary" N axis).
    @pl.when(i == 0)
    def _():
        kv_ref[0] = jnp.zeros(kv_ref.shape[1:], jnp.float32)
        kmean_ref[0] = jnp.zeros(kmean_ref.shape[1:], jnp.float32)

    kv_ref[0] += lax.dot_general(
        k.astype(jnp.bfloat16), v.astype(jnp.bfloat16),
        dimension_numbers=(((0,), (0,)), ((), ())),
        preferred_element_type=jnp.float32)                            # (C, C)
    kmean_ref[0] += jnp.sum(k, axis=0, keepdims=True)                  # (1, C)

    @pl.when(i == n_tiles - 1)
    def _():
        # Block-diagonal head mask with 1/N folded in (precomputed on host).
        kv_ref[0] = kv_ref[0] * maskn_ref[...]
        kmean_ref[0] = kmean_ref[0] * inv_n


def qkv_focus_project(x, w_qkv, pos, inv_scale, mask_n, focusing_factor, n_tile):
    B, N, C = x.shape
    tn = _pick_n_tile(N, n_tile)
    nT = N // tn
    kernel = functools.partial(_qkv_focus_kernel,
                               focusing_factor=focusing_factor, inv_n=1.0 / N)
    grid_spec = pltpu.PrefetchScalarGridSpec(
        num_scalar_prefetch=0,
        grid=(B, nT),
        in_specs=[
            pl.BlockSpec((1, tn, C), lambda b, i: (b, i, 0)),      # x tile
            pl.BlockSpec((C, 3 * C), lambda b, i: (0, 0)),         # w_qkv (const)
            pl.BlockSpec((tn, C), lambda b, i: (i, 0)),            # pos tile (bf16)
            pl.BlockSpec((1, C), lambda b, i: (0, 0)),             # 1/softplus(scale)
            pl.BlockSpec((C, C), lambda b, i: (0, 0)),             # mask/N (const)
        ],
        out_specs=[
            pl.BlockSpec((1, tn, C), lambda b, i: (b, i, 0)),      # q_focus (bf16)
            pl.BlockSpec((1, tn, C), lambda b, i: (b, i, 0)),      # v (bf16)
            pl.BlockSpec((1, C, C), lambda b, i: (b, 0, 0)),       # kv accumulator
            pl.BlockSpec((1, 1, C), lambda b, i: (b, 0, 0)),       # k_mean accumulator
        ],
    )
    out_shape = [
        jax.ShapeDtypeStruct((B, N, C), jnp.bfloat16),
        jax.ShapeDtypeStruct((B, N, C), jnp.bfloat16),
        jax.ShapeDtypeStruct((B, C, C), jnp.float32),
        jax.ShapeDtypeStruct((B, 1, C), jnp.float32),
    ]
    return pl.pallas_call(
        kernel,
        out_shape=out_shape,
        grid_spec=grid_spec,
        compiler_params=pltpu.CompilerParams(
            dimension_semantics=("parallel", "arbitrary"),
            vmem_limit_bytes=_VMEM_LIMIT),
    )(x, w_qkv, pos, inv_scale, mask_n)


# --------------------------------------------------------------------------
# Kernel B: linear-attention application (q@kv)*z  +  depthwise KxK conv on v
# (in-kernel halo padding in a VMEM scratch)  +  output projection, per batch.
# --------------------------------------------------------------------------
def _attn_conv_proj_kernel(qf_ref, kv_ref, kmean_ref, v_ref, hind_ref, hindt_ref,
                           dwcw_ref, dwcb_ref, wp_ref, bp_ref, o_ref, vpad_scr,
                           *, H, W, K):
    C = qf_ref.shape[2]
    N = H * W
    P = K // 2

    # attn = q @ kv  (kv already block-diag masked and 1/N-scaled in Kernel A).
    q_bf = qf_ref[0]                                                   # (N, C) bf16
    attn = jnp.dot(q_bf, kv_ref[0].astype(jnp.bfloat16),
                   preferred_element_type=jnp.float32)                 # (N, C)

    # z = 1 / (per-head <q, mean(k)> + eps): exact f32 reciprocal, broadcast back to
    # C lanes via skinny head-indicator matmuls (2*N*C*heads MACs vs N*C^2).
    t = q_bf.astype(jnp.float32) * kmean_ref[0]                        # (N, C)
    denom_h = jnp.dot(t, hind_ref[...], preferred_element_type=jnp.float32)   # (N, nh)
    z_h = 1.0 / (denom_h + 1e-6)
    z = jnp.dot(z_h, hindt_ref[...], preferred_element_type=jnp.float32)      # (N, C)
    attn_x = attn * z

    # Depthwise KxK conv on v with in-kernel halo padding (no XLA pad round trip).
    vpad_scr[...] = jnp.zeros(vpad_scr.shape, jnp.float32)
    vpad_scr[P:P + H, P:P + W, :] = v_ref[0].astype(jnp.float32)
    w = dwcw_ref[...]                                                  # (K, K, C)
    acc = vpad_scr[0:H, 0:W, :] * w[0, 0, :]                           # first tap inits acc
    for ky in range(K):
        for kx in range(K):
            if ky == 0 and kx == 0:
                continue
            acc = acc + vpad_scr[ky:ky + H, kx:kx + W, :] * w[ky, kx, :]
    conv = acc.reshape(N, C) + dwcb_ref[...]                           # (N, C)

    y = (attn_x + conv).astype(jnp.bfloat16)
    o_ref[0] = jnp.dot(y, wp_ref[...],
                       preferred_element_type=jnp.float32) + bp_ref[...]


def attn_conv_output_proj(q_f, kv, k_mean, v_img, head_ind, head_ind_t,
                          dwc_w, dwc_b, wp, bp, H, W, K):
    B, N, C = q_f.shape
    nh = head_ind.shape[1]
    kernel = functools.partial(_attn_conv_proj_kernel, H=H, W=W, K=K)
    grid_spec = pltpu.PrefetchScalarGridSpec(
        num_scalar_prefetch=0,
        grid=(B,),
        in_specs=[
            pl.BlockSpec((1, N, C), lambda b: (b, 0, 0)),          # q_focus (bf16)
            pl.BlockSpec((1, C, C), lambda b: (b, 0, 0)),          # kv
            pl.BlockSpec((1, 1, C), lambda b: (b, 0, 0)),          # k_mean
            pl.BlockSpec((1, H, W, C), lambda b: (b, 0, 0, 0)),    # v image (bf16)
            pl.BlockSpec((C, nh), lambda b: (0, 0)),               # head indicator
            pl.BlockSpec((nh, C), lambda b: (0, 0)),               # head indicator^T
            pl.BlockSpec((K, K, C), lambda b: (0, 0, 0)),          # dwc weights (tiled)
            pl.BlockSpec((1, C), lambda b: (0, 0)),                # dwc bias (tiled)
            pl.BlockSpec((C, C), lambda b: (0, 0)),                # proj weight (bf16)
            pl.BlockSpec((1, C), lambda b: (0, 0)),                # proj bias
        ],
        out_specs=pl.BlockSpec((1, N, C), lambda b: (b, 0, 0)),
        scratch_shapes=[pltpu.VMEM((H + K - 1, W + K - 1, C), jnp.float32)],
    )
    return pl.pallas_call(
        kernel,
        out_shape=jax.ShapeDtypeStruct((B, N, C), jnp.float32),
        grid_spec=grid_spec,
        compiler_params=pltpu.CompilerParams(
            dimension_semantics=("parallel",),
            vmem_limit_bytes=_VMEM_LIMIT),
    )(q_f, kv, k_mean, v_img, head_ind, head_ind_t, dwc_w, dwc_b, wp, bp)


# --------------------------------------------------------------------------
# Full forward (host-side glue: weight concat / casts / constant mask tables)
# --------------------------------------------------------------------------
def focused_linear_attention(x, H, W, params, num_heads, focusing_factor,
                             kernel_size, n_tile=512):
    B, N, C = x.shape
    K = kernel_size
    d = C // num_heads

    # Host-side prep (all cheap, weight-sized, done once):
    inv_scale = (1.0 / jax.nn.softplus(params["scale"])).reshape(1, C).astype(jnp.float32)
    pos = params["pos"].reshape(N, C).astype(jnp.bfloat16)
    w_qkv = jnp.concatenate([params["wq"], params["wk"], params["wv"]],
                            axis=1).astype(jnp.bfloat16)                    # (C, 3C)
    wp = params["wp"].astype(jnp.bfloat16)
    bp = params["bp"].reshape(1, C).astype(jnp.float32)
    # Depthwise filters depend only on the within-head channel -> tile across heads.
    dwc_w = jnp.tile(params["dwc_w"], (1, 1, num_heads)).astype(jnp.float32)  # (K, K, C)
    dwc_b = jnp.tile(params["dwc_b"], (num_heads,)).reshape(1, C).astype(jnp.float32)

    # Hoisted constants: block-diag head mask (1/N folded in) + skinny head indicators.
    heads = np.arange(C) // d
    mask_n = jnp.asarray((heads[:, None] == heads[None, :]).astype(np.float32) / float(N))
    hind_np = np.eye(num_heads, dtype=np.float32)[heads]                     # (C, nh)
    head_ind = jnp.asarray(hind_np)
    head_ind_t = jnp.asarray(hind_np.T)

    # Kernel A: N-tiled qkv projection + focus; per-batch kv / k_mean accumulation.
    q_f, v, kv, k_mean = qkv_focus_project(
        x, w_qkv, pos, inv_scale, mask_n, focusing_factor, n_tile)

    # Spatial layout for the conv branch is a free metadata reshape (no pad, no copy).
    v_img = v.reshape(B, H, W, C)

    # Kernel B: attention application + depthwise conv (in-kernel halo) + projection.
    return attn_conv_output_proj(q_f, kv, k_mean, v_img, head_ind, head_ind_t,
                                 dwc_w, dwc_b, wp, bp, H, W, K)


# --------------------------------------------------------------------------
# Pure-JAX f32 reference (matches the PyTorch module, sr_ratio=1, 'torch' mode)
# --------------------------------------------------------------------------
def reference(x, H, W, params, num_heads, ff, K):
    B, N, C = x.shape
    d = C // num_heads
    q = x @ params["wq"]
    k = x @ params["wk"] + params["pos"]
    v = x @ params["wv"]
    scale = jax.nn.softplus(params["scale"])

    def focus(t):
        t = jnp.maximum(t, 0.0) + 1e-6
        t = t / scale
        tn = jnp.linalg.norm(t, axis=-1, keepdims=True)
        tp = t ** ff
        return tp / jnp.linalg.norm(tp, axis=-1, keepdims=True) * tn

    q, k = focus(q), focus(k)
    qh = q.reshape(B, N, num_heads, d).transpose(0, 2, 1, 3)
    kh = k.reshape(B, N, num_heads, d).transpose(0, 2, 1, 3)
    vh = v.reshape(B, N, num_heads, d).transpose(0, 2, 1, 3)
    n = N
    z = 1.0 / (qh @ kh.mean(axis=-2, keepdims=True).transpose(0, 1, 3, 2) + 1e-6)
    kv = (kh.transpose(0, 1, 3, 2) * n ** (-0.5)) @ (vh * n ** (-0.5))
    attn_x = ((qh @ kv) * z).transpose(0, 2, 1, 3).reshape(B, N, C)

    v_img = vh.reshape(B * num_heads, H, W, d).transpose(0, 3, 1, 2)      # NCHW
    w_oihw = params["dwc_w"].transpose(2, 0, 1)[:, None, :, :]            # (d,1,K,K)
    conv = jax.lax.conv_general_dilated(
        v_img, w_oihw, (1, 1), [(K // 2, K // 2)] * 2,
        feature_group_count=d, dimension_numbers=("NCHW", "OIHW", "NCHW"))
    conv = conv + params["dwc_b"][None, :, None, None]
    dwc_x = conv.reshape(B, C, N).transpose(0, 2, 1)

    return (attn_x + dwc_x) @ params["wp"] + params["bp"]


# --------------------------------------------------------------------------
if __name__ == "__main__":
    B, Himg, Wimg = 2, 8, 8
    C, num_heads = 32, 4
    N = Himg * Wimg
    d = C // num_heads
    K = 5                 # kernel_size
    ff = 3                # focusing_factor

    key = jax.random.PRNGKey(0)
    ks = jax.random.split(key, 12)
    f32 = jnp.float32
    params = {
        "wq":    jax.random.normal(ks[0], (C, C), f32) / np.sqrt(C),
        "wk":    jax.random.normal(ks[1], (C, C), f32) / np.sqrt(C),
        "wv":    jax.random.normal(ks[2], (C, C), f32) / np.sqrt(C),
        "wp":    jax.random.normal(ks[3], (C, C), f32) / np.sqrt(C),
        "bp":    jax.random.normal(ks[4], (C,), f32) * 0.1,
        "dwc_w": jax.random.normal(ks[5], (K, K, d), f32) * 0.1,
        "dwc_b": jax.random.normal(ks[6], (d,), f32) * 0.1,
        "scale": jax.random.normal(ks[7], (1, 1, C), f32) * 0.1,
        "pos":   jax.random.normal(ks[8], (1, N, C), f32) * 0.02,
    }
    x = jax.random.normal(ks[9], (B, N, C), f32)

    # n_tile=32 -> two N-tiles, exercising the kv / k_mean accumulation path.
    out = focused_linear_attention(x, Himg, Wimg, params, num_heads, ff, K, n_tile=32)
    out = jax.block_until_ready(out)

    ref = reference(x, Himg, Wimg, params, num_heads, ff, K)
    assert out.shape == (B, N, C)
    # bf16 MXU operands / bf16 intermediates (f32 accumulation) vs a pure-f32 reference
    # -> slightly looser tolerance than an all-f32 comparison.
    np.testing.assert_allclose(np.asarray(out), np.asarray(ref), rtol=5e-2, atol=1e-1)

    print("KERNEL_OK")
</pallas_src>

<mosaic_0001>
module attributes {stable_mosaic.version = 11 : i64} {
  func.func @_qkv_focus_kernel(%arg0: i32, %arg1: i32, %arg2: memref<1x32x32xf32, #tpu.memory_space<vmem>>, %arg3: memref<32x96xbf16, #tpu.memory_space<vmem>>, %arg4: memref<32x32xbf16, #tpu.memory_space<vmem>>, %arg5: memref<1x32xf32, #tpu.memory_space<vmem>>, %arg6: memref<32x32xf32, #tpu.memory_space<vmem>>, %arg7: memref<1x32x32xbf16, #tpu.memory_space<vmem>>, %arg8: memref<1x32x32xbf16, #tpu.memory_space<vmem>>, %arg9: memref<1x32x32xf32, #tpu.memory_space<vmem>>, %arg10: memref<1x1x32xf32, #tpu.memory_space<vmem>>) attributes {dimension_semantics = [#tpu.dimension_semantics<parallel>, #tpu.dimension_semantics<arbitrary>], iteration_bounds = array<i64: 2, 2>, scalar_prefetch = 0 : i64, scratch_operands = 0 : i64, tpu.core_type = #tpu.core_type<tc>, window_params = [{transform_indices = @transform_0, window_bounds = array<i64: 1, 32, 32>}, {pipeline_mode = #tpu.pipeline_mode<synchronous>, transform_indices = @transform_1, window_bounds = array<i64: 32, 96>}, {transform_indices = @transform_2, window_bounds = array<i64: 32, 32>}, {pipeline_mode = #tpu.pipeline_mode<synchronous>, transform_indices = @transform_3, window_bounds = array<i64: 1, 32>}, {pipeline_mode = #tpu.pipeline_mode<synchronous>, transform_indices = @transform_4, window_bounds = array<i64: 32, 32>}, {transform_indices = @transform_5, window_bounds = array<i64: 1, 32, 32>}, {transform_indices = @transform_6, window_bounds = array<i64: 1, 32, 32>}, {transform_indices = @transform_7, window_bounds = array<i64: 1, 32, 32>}, {transform_indices = @transform_8, window_bounds = array<i64: 1, 1, 32>}]} {
    %c0 = arith.constant 0 : index
    %c0_0 = arith.constant 0 : index
    %c0_1 = arith.constant 0 : index
    %0 = vector.load %arg2[%c0, %c0_0, %c0_1] : memref<1x32x32xf32, #tpu.memory_space<vmem>>, vector<1x32x32xf32>
    %1 = vector.shape_cast %0 : vector<1x32x32xf32> to vector<32x32xf32>
    %2 = arith.truncf %1 : vector<32x32xf32> to vector<32x32xbf16>
    %c0_2 = arith.constant 0 : index
    %c0_3 = arith.constant 0 : index
    %3 = vector.load %arg3[%c0_2, %c0_3] : memref<32x96xbf16, #tpu.memory_space<vmem>>, vector<32x96xbf16>
    %cst = arith.constant dense<0.000000e+00> : vector<32x96xf32>
    %4 = tpu.matmul %2, %3, %cst {dimension_numbers = #tpu.dot_dimension_numbers<[1], [0], [0], [1], [0, 0, 1, 1], [], []>} : vector<32x32xbf16>, vector<32x96xbf16>, vector<32x96xf32> -> vector<32x96xf32>
    %5 = vector.extract_strided_slice %4 {offsets = [0, 0], sizes = [32, 32], strides = [1, 1]} : vector<32x96xf32> to vector<32x32xf32>
    %6 = vector.extract_strided_slice %4 {offsets = [0, 32], sizes = [32, 32], strides = [1, 1]} : vector<32x96xf32> to vector<32x32xf32>
    %c0_4 = arith.constant 0 : index
    %c0_5 = arith.constant 0 : index
    %7 = vector.load %arg4[%c0_4, %c0_5] : memref<32x32xbf16, #tpu.memory_space<vmem>>, vector<32x32xbf16>
    %8 = arith.extf %7 : vector<32x32xbf16> to vector<32x32xf32>
    %9 = arith.addf %6, %8 : vector<32x32xf32>
    %10 = vector.extract_strided_slice %4 {offsets = [0, 64], sizes = [32, 32], strides = [1, 1]} : vector<32x96xf32> to vector<32x32xf32>
    %c0_6 = arith.constant 0 : index
    %c0_7 = arith.constant 0 : index
    %11 = vector.load %arg5[%c0_6, %c0_7] : memref<1x32xf32, #tpu.memory_space<vmem>>, vector<1x32xf32>
    %cst_8 = arith.constant 0.000000e+00 : f32
    %12 = vector.broadcast %cst_8 : f32 to vector<32x32xf32>
    %13 = arith.maximumf %5, %12 : vector<32x32xf32>
    %cst_9 = arith.constant 9.99999997E-7 : f32
    %14 = vector.broadcast %cst_9 : f32 to vector<32x32xf32>
    %15 = arith.addf %13, %14 : vector<32x32xf32>
    %16 = vector.broadcast %11 : vector<1x32xf32> to vector<32x32xf32>
    %17 = arith.mulf %15, %16 : vector<32x32xf32>
    %18 = arith.mulf %17, %17 : vector<32x32xf32>
    %cst_10 = arith.constant dense<0.000000e+00> : vector<32xf32>
    %19 = vector.multi_reduction <add>, %18, %cst_10 [1] : vector<32x32xf32> to vector<32xf32>
    %20 = vector.shape_cast %19 : vector<32xf32> to vector<32x1xf32>
    %21 = arith.mulf %17, %17 : vector<32x32xf32>
    %22 = arith.mulf %21, %17 : vector<32x32xf32>
    %23 = arith.mulf %22, %22 : vector<32x32xf32>
    %cst_11 = arith.constant dense<0.000000e+00> : vector<32xf32>
    %24 = vector.multi_reduction <add>, %23, %cst_11 [1] : vector<32x32xf32> to vector<32xf32>
    %25 = vector.shape_cast %24 : vector<32xf32> to vector<32x1xf32>
    %26 = math.sqrt %20 : vector<32x1xf32>
    %27 = math.rsqrt %25 : vector<32x1xf32>
    %28 = arith.mulf %26, %27 : vector<32x1xf32>
    %29 = vector.broadcast %28 : vector<32x1xf32> to vector<32x32xf32>
    %30 = arith.mulf %22, %29 : vector<32x32xf32>
    %cst_12 = arith.constant 0.000000e+00 : f32
    %31 = vector.broadcast %cst_12 : f32 to vector<32x32xf32>
    %32 = arith.maximumf %9, %31 : vector<32x32xf32>
    %cst_13 = arith.constant 9.99999997E-7 : f32
    %33 = vector.broadcast %cst_13 : f32 to vector<32x32xf32>
    %34 = arith.addf %32, %33 : vector<32x32xf32>
    %35 = vector.broadcast %11 : vector<1x32xf32> to vector<32x32xf32>
    %36 = arith.mulf %34, %35 : vector<32x32xf32>
    %37 = arith.mulf %36, %36 : vector<32x32xf32>
    %cst_14 = arith.constant dense<0.000000e+00> : vector<32xf32>
    %38 = vector.multi_reduction <add>, %37, %cst_14 [1] : vector<32x32xf32> to vector<32xf32>
    %39 = vector.shape_cast %38 : vector<32xf32> to vector<32x1xf32>
    %40 = arith.mulf %36, %36 : vector<32x32xf32>
    %41 = arith.mulf %40, %36 : vector<32x32xf32>
    %42 = arith.mulf %41, %41 : vector<32x32xf32>
    %cst_15 = arith.constant dense<0.000000e+00> : vector<32xf32>
    %43 = vector.multi_reduction <add>, %42, %cst_15 [1] : vector<32x32xf32> to vector<32xf32>
    %44 = vector.shape_cast %43 : vector<32xf32> to vector<32x1xf32>
    %45 = math.sqrt %39 : vector<32x1xf32>
    %46 = math.rsqrt %44 : vector<32x1xf32>
    %47 = arith.mulf %45, %46 : vector<32x1xf32>
    %48 = vector.broadcast %47 : vector<32x1xf32> to vector<32x32xf32>
    %49 = arith.mulf %41, %48 : vector<32x32xf32>
    %50 = arith.truncf %30 : vector<32x32xf32> to vector<32x32xbf16>
    %c0_16 = arith.constant 0 : index
    %c0_17 = arith.constant 0 : index
    %c0_18 = arith.constant 0 : index
    %51 = vector.load %arg7[%c0_16, %c0_17, %c0_18] : memref<1x32x32xbf16, #tpu.memory_space<vmem>>, vector<1x32x32xbf16>
    %52 = vector.shape_cast %51 : vector<1x32x32xbf16> to vector<32x32xbf16>
    %53 = vector.shape_cast %50 : vector<32x32xbf16> to vector<1x32x32xbf16>
    tpu.vector_store %arg7[%c0_16, %c0_17, %c0_18], %53 {strides = array<i32>} : memref<1x32x32xbf16, #tpu.memory_space<vmem>>, vector<1x32x32xbf16>,
    %54 = arith.truncf %10 : vector<32x32xf32> to vector<32x32xbf16>
    %c0_19 = arith.constant 0 : index
    %c0_20 = arith.constant 0 : index
    %c0_21 = arith.constant 0 : index
    %55 = vector.load %arg8[%c0_19, %c0_20, %c0_21] : memref<1x32x32xbf16, #tpu.memory_space<vmem>>, vector<1x32x32xbf16>
    %56 = vector.shape_cast %55 : vector<1x32x32xbf16> to vector<32x32xbf16>
    %57 = vector.shape_cast %54 : vector<32x32xbf16> to vector<1x32x32xbf16>
    tpu.vector_store %arg8[%c0_19, %c0_20, %c0_21], %57 {strides = array<i32>} : memref<1x32x32xbf16, #tpu.memory_space<vmem>>, vector<1x32x32xbf16>,
    %c0_i32 = arith.constant 0 : i32
    %58 = arith.cmpi eq, %arg1, %c0_i32 : i32
    %59 = arith.extui %58 : i1 to i32
    %c0_i32_22 = arith.constant 0 : i32
    %60 = arith.cmpi ne, %59, %c0_i32_22 : i32
    scf.if %60 {
      %cst_38 = arith.constant 0.000000e+00 : f32
      %81 = vector.broadcast %cst_38 : f32 to vector<32x32xf32>
      %c0_39 = arith.constant 0 : index
      %c0_40 = arith.constant 0 : index
      %c0_41 = arith.constant 0 : index
      %82 = vector.load %arg9[%c0_39, %c0_40, %c0_41] : memref<1x32x32xf32, #tpu.memory_space<vmem>>, vector<1x32x32xf32>
      %83 = vector.shape_cast %82 : vector<1x32x32xf32> to vector<32x32xf32>
      %84 = vector.shape_cast %81 : vector<32x32xf32> to vector<1x32x32xf32>
      tpu.vector_store %arg9[%c0_39, %c0_40, %c0_41], %84 {strides = array<i32>} : memref<1x32x32xf32, #tpu.memory_space<vmem>>, vector<1x32x32xf32>,
      %cst_42 = arith.constant 0.000000e+00 : f32
      %85 = vector.broadcast %cst_42 : f32 to vector<1x32xf32>
      %c0_43 = arith.constant 0 : index
      %c0_44 = arith.constant 0 : index
      %c0_45 = arith.constant 0 : index
      %86 = vector.load %arg10[%c0_43, %c0_44, %c0_45] : memref<1x1x32xf32, #tpu.memory_space<vmem>>, vector<1x1x32xf32>
      %87 = vector.shape_cast %86 : vector<1x1x32xf32> to vector<1x32xf32>
      %88 = vector.shape_cast %85 : vector<1x32xf32> to vector<1x1x32xf32>
      tpu.vector_store %arg10[%c0_43, %c0_44, %c0_45], %88 {strides = array<i32>} : memref<1x1x32xf32, #tpu.memory_space<vmem>>, vector<1x1x32xf32>,
    } else {
    }
    %c0_23 = arith.constant 0 : index
    %c0_24 = arith.constant 0 : index
    %c0_25 = arith.constant 0 : index
    %61 = vector.load %arg9[%c0_23, %c0_24, %c0_25] : memref<1x32x32xf32, #tpu.memory_space<vmem>>, vector<1x32x32xf32>
    %62 = vector.shape_cast %61 : vector<1x32x32xf32> to vector<32x32xf32>
    %63 = arith.truncf %49 : vector<32x32xf32> to vector<32x32xbf16>
    %64 = arith.truncf %10 : vector<32x32xf32> to vector<32x32xbf16>
    %cst_26 = arith.constant dense<0.000000e+00> : vector<32x32xf32>
    %65 = tpu.matmul %63, %64, %cst_26 {dimension_numbers = #tpu.dot_dimension_numbers<[0], [0], [1], [1], [0, 1, 1, 1], [], []>} : vector<32x32xbf16>, vector<32x32xbf16>, vector<32x32xf32> -> vector<32x32xf32>
    %66 = arith.addf %62, %65 : vector<32x32xf32>
    %c0_27 = arith.constant 0 : index
    %c0_28 = arith.constant 0 : index
    %c0_29 = arith.constant 0 : index
    %67 = vector.load %arg9[%c0_27, %c0_28, %c0_29] : memref<1x32x32xf32, #tpu.memory_space<vmem>>, vector<1x32x32xf32>
    %68 = vector.shape_cast %67 : vector<1x32x32xf32> to vector<32x32xf32>
    %69 = vector.shape_cast %66 : vector<32x32xf32> to vector<1x32x32xf32>
    tpu.vector_store %arg9[%c0_27, %c0_28, %c0_29], %69 {strides = array<i32>} : memref<1x32x32xf32, #tpu.memory_space<vmem>>, vector<1x32x32xf32>,
    %c0_30 = arith.constant 0 : index
    %c0_31 = arith.constant 0 : index
    %c0_32 = arith.constant 0 : index
    %70 = vector.load %arg10[%c0_30, %c0_31, %c0_32] : memref<1x1x32xf32, #tpu.memory_space<vmem>>, vector<1x1x32xf32>
    %71 = vector.shape_cast %70 : vector<1x1x32xf32> to vector<1x32xf32>
    %cst_33 = arith.constant dense<0.000000e+00> : vector<32xf32>
    %72 = vector.multi_reduction <add>, %49, %cst_33 [0] : vector<32x32xf32> to vector<32xf32>
    %73 = vector.shape_cast %72 : vector<32xf32> to vector<1x32xf32>
    %74 = arith.addf %71, %73 : vector<1x32xf32>
    %c0_34 = arith.constant 0 : index
    %c0_35 = arith.constant 0 : index
    %c0_36 = arith.constant 0 : index
    %75 = vector.load %arg10[%c0_34, %c0_35, %c0_36] : memref<1x1x32xf32, #tpu.memory_space<vmem>>, vector<1x1x32xf32>
    %76 = vector.shape_cast %75 : vector<1x1x32xf32> to vector<1x32xf32>
    %77 = vector.shape_cast %74 : vector<1x32xf32> to vector<1x1x32xf32>
    tpu.vector_store %arg10[%c0_34, %c0_35, %c0_36], %77 {strides = array<i32>} : memref<1x1x32xf32, #tpu.memory_space<vmem>>, vector<1x1x32xf32>,
    %c1_i32 = arith.constant 1 : i32
    %78 = arith.cmpi eq, %arg1, %c1_i32 : i32
    %79 = arith.extui %78 : i1 to i32
    %c0_i32_37 = arith.constant 0 : i32
    %80 = arith.cmpi ne, %79, %c0_i32_37 : i32
    scf.if %80 {
      %c0_38 = arith.constant 0 : index
      %c0_39 = arith.constant 0 : index
      %c0_40 = arith.constant 0 : index
      %81 = vector.load %arg9[%c0_38, %c0_39, %c0_40] : memref<1x32x32xf32, #tpu.memory_space<vmem>>, vector<1x32x32xf32>
      %82 = vector.shape_cast %81 : vector<1x32x32xf32> to vector<32x32xf32>
      %c0_41 = arith.constant 0 : index
      %c0_42 = arith.constant 0 : index
      %83 = vector.load %arg6[%c0_41, %c0_42] : memref<32x32xf32, #tpu.memory_space<vmem>>, vector<32x32xf32>
      %84 = arith.mulf %82, %83 : vector<32x32xf32>
      %c0_43 = arith.constant 0 : index
      %c0_44 = arith.constant 0 : index
      %c0_45 = arith.constant 0 : index
      %85 = vector.load %arg9[%c0_43, %c0_44, %c0_45] : memref<1x32x32xf32, #tpu.memory_space<vmem>>, vector<1x32x32xf32>
      %86 = vector.shape_cast %85 : vector<1x32x32xf32> to vector<32x32xf32>
      %87 = vector.shape_cast %84 : vector<32x32xf32> to vector<1x32x32xf32>
      tpu.vector_store %arg9[%c0_43, %c0_44, %c0_45], %87 {strides = array<i32>} : memref<1x32x32xf32, #tpu.memory_space<vmem>>, vector<1x32x32xf32>,
      %c0_46 = arith.constant 0 : index
      %c0_47 = arith.constant 0 : index
      %c0_48 = arith.constant 0 : index
      %88 = vector.load %arg10[%c0_46, %c0_47, %c0_48] : memref<1x1x32xf32, #tpu.memory_space<vmem>>, vector<1x1x32xf32>
      %89 = vector.shape_cast %88 : vector<1x1x32xf32> to vector<1x32xf32>
      %cst_49 = arith.constant 1.562500e-02 : f32
      %90 = vector.broadcast %cst_49 : f32 to vector<1x32xf32>
      %91 = arith.mulf %89, %90 : vector<1x32xf32>
      %c0_50 = arith.constant 0 : index
      %c0_51 = arith.constant 0 : index
      %c0_52 = arith.constant 0 : index
      %92 = vector.load %arg10[%c0_50, %c0_51, %c0_52] : memref<1x1x32xf32, #tpu.memory_space<vmem>>, vector<1x1x32xf32>
      %93 = vector.shape_cast %92 : vector<1x1x32xf32> to vector<1x32xf32>
      %94 = vector.shape_cast %91 : vector<1x32xf32> to vector<1x1x32xf32>
      tpu.vector_store %arg10[%c0_50, %c0_51, %c0_52], %94 {strides = array<i32>} : memref<1x1x32xf32, #tpu.memory_space<vmem>>, vector<1x1x32xf32>,
    } else {
    }
    return
  }
  func.func @transform_0(%arg0: i32, %arg1: i32) -> (i32, i32, i32) {
    %c0_i32 = arith.constant 0 : i32
    %c0_i32_0 = arith.constant 0 : i32
    return %arg0, %arg1, %c0_i32 : i32, i32, i32
  }
  func.func @transform_1(%arg0: i32, %arg1: i32) -> (i32, i32) {
    %c0_i32 = arith.constant 0 : i32
    %c0_i32_0 = arith.constant 0 : i32
    %c0_i32_1 = arith.constant 0 : i32
    return %c0_i32, %c0_i32_0 : i32, i32
  }
  func.func @transform_2(%arg0: i32, %arg1: i32) -> (i32, i32) {
    %c0_i32 = arith.constant 0 : i32
    %c0_i32_0 = arith.constant 0 : i32
    return %arg1, %c0_i32 : i32, i32
  }
  func.func @transform_3(%arg0: i32, %arg1: i32) -> (i32, i32) {
    %c0_i32 = arith.constant 0 : i32
    %c0_i32_0 = arith.constant 0 : i32
    %c0_i32_1 = arith.constant 0 : i32
    return %c0_i32, %c0_i32_0 : i32, i32
  }
  func.func @transform_4(%arg0: i32, %arg1: i32) -> (i32, i32) {
    %c0_i32 = arith.constant 0 : i32
    %c0_i32_0 = arith.constant 0 : i32
    %c0_i32_1 = arith.constant 0 : i32
    return %c0_i32, %c0_i32_0 : i32, i32
  }
  func.func @transform_5(%arg0: i32, %arg1: i32) -> (i32, i32, i32) {
    %c0_i32 = arith.constant 0 : i32
    %c0_i32_0 = arith.constant 0 : i32
    return %arg0, %arg1, %c0_i32 : i32, i32, i32
  }
  func.func @transform_6(%arg0: i32, %arg1: i32) -> (i32, i32, i32) {
    %c0_i32 = arith.constant 0 : i32
    %c0_i32_0 = arith.constant 0 : i32
    return %arg0, %arg1, %c0_i32 : i32, i32, i32
  }
  func.func @transform_7(%arg0: i32, %arg1: i32) -> (i32, i32, i32) {
    %c0_i32 = arith.constant 0 : i32
    %c0_i32_0 = arith.constant 0 : i32
    %c0_i32_1 = arith.constant 0 : i32
    return %arg0, %c0_i32, %c0_i32_0 : i32, i32, i32
  }
  func.func @transform_8(%arg0: i32, %arg1: i32) -> (i32, i32, i32) {
    %c0_i32 = arith.constant 0 : i32
    %c0_i32_0 = arith.constant 0 : i32
    %c0_i32_1 = arith.constant 0 : i32
    return %arg0, %c0_i32, %c0_i32_0 : i32, i32, i32
  }
}

</mosaic_0001>

<llo_original>
// kernel: tpu_custom_call.1
$region0: #{tpu_custom_call.1}
  #allocation0 [shape = 'u32[]', space=smem, size = 0x4, offset = 0x4, fixed_abs, tag = 'smem constant byte address 0x4 - core index']
  #allocation1 [shape = 'u32[144,128]{1,0:T(1,128)}', space=vmem, size = 0x12000, scoped, tag = 'internal scratch']
  %s0 = inlined_call_operand.vmem [shape: f32[2,64,32], index: 0, kind: input, shape index: {}]
  %s1 = inlined_call_operand.vmem [shape: bf16[32,96], index: 1, kind: input, shape index: {}]
  %s2 = inlined_call_operand.vmem [shape: bf16[64,32], index: 2, kind: input, shape index: {}]
  %s3 = inlined_call_operand.vmem [shape: f32[1,32], index: 3, kind: input, shape index: {}]
  %s4 = inlined_call_operand.vmem [shape: f32[32,32], index: 4, kind: input, shape index: {}]
  %s5 = inlined_call_operand.vmem [shape: bf16[2,64,32], index: 5, kind: output, shape index: {0}]
  %s6 = inlined_call_operand.vmem [shape: bf16[2,64,32], index: 6, kind: output, shape index: {1}]
  %s7 = inlined_call_operand.hbm [shape: f32[2,32,32], index: 7, kind: output, shape index: {2}]
  %s8 = inlined_call_operand.hbm [shape: f32[2,1,32], index: 8, kind: output, shape index: {3}]
  %9 = xla_tuple %s5, %s6, %s7, %s8
  %s10 = sld [smem:[#allocation0]]
  $region85: #{tpu_custom_call.1} parent=0
    _
  %s12 = ssub.s32 1, %s10
  %s13 = scalar_select 0, %s12, %s10
  $region1: #{tpu_custom_call.1} parent=0
    #allocation2 [shape = 'u8[32768]{0}', space=vmem, size = 0x8000, scoped, tag = 'output window, operand 2']
    #allocation3 [shape = 's32[2]{0}', space=sflag, size = 0x8, scoped, tag = 'scoped memory for tpu_custom_call.1']
    #allocation4 [shape = 'u8[1024]{0}', space=vmem, size = 0x400, scoped, tag = 'output window, operand 3']
    #allocation5 [shape = 's32[2]{0}', space=sflag, size = 0x8, scoped, tag = 'scoped memory for tpu_custom_call.1']
    %14 = vsyncpa [#allocation3], 0
    %s15 = scalar_lea.sflag [#allocation3], 1
    %16 = vsyncpa %s15, 0
    %17 = vsyncpa [#allocation5], 0
    %s18 = scalar_lea.sflag [#allocation5], 1
    %19 = vsyncpa %s18, 0
    loop: start=0, step=1, limit=6
    $region2: #{tpu_custom_call.1} parent=1 // loop_pre_header
      _
    $region3: #{tpu_custom_call.1} parent=1 // loop_header
      %s21 = sphi 0, %s25
      %p22 = scmp.ge.s32.totalorder %s21, 6
      %s28 = sphi 0, %s40
      %s29 = sphi 0, %s36
      %s30 = sphi 0, %s28
      %s31 = sphi 0, %s29
      %s32 = sphi 0, %s30
      %s33 = sphi 0, %s31
      %s45 = sphi 0, %s47
      %s48 = sphi 0, %s45
      %s49 = sphi 0, %s48
      %s65 = sphi 0, %s49
      %s69 = sphi 0, %s69
      %s71 = sphi 0, %s69
      %s72 = sphi 0, %s71
      %s86 = sphi 0, %s72
      %s92 = sphi 0, %s94
      %s95 = sphi 0, %s92
      %s96 = sphi 0, %s95
      %s112 = sphi 0, %s96
      %s116 = sphi 0, %s116
      %s118 = sphi 0, %s116
      %s119 = sphi 0, %s118
      %s133 = sphi 0, %s119
      %s137 = sphi 0, %s137
      %s139 = sphi 0, %s137
      %s140 = sphi 0, %s139
      %s154 = sphi 0, %s140
      %s162 = sphi 0, %s164
      %s165 = sphi 0, %s162
      %s166 = sphi 0, %s165
      %s182 = sphi 0, %s166
      %s190 = sphi 0, %s192
      %s193 = sphi 0, %s190
      %s194 = sphi 0, %s193
      %s210 = sphi 0, %s194
      %s216 = sphi 0, %s218
      %s219 = sphi 0, %s216
      %s220 = sphi 0, %s219
      %s236 = sphi 0, %s220
      %s242 = sphi 0, %s244
      %s245 = sphi 0, %s242
      %s246 = sphi 0, %s245
      %s262 = sphi 0, %s246
    $region4: #{tpu_custom_call.1} parent=1 // loop_header_branch
      %24 = sbr.rel (%p22) target = $region8
    $region5: #{tpu_custom_call.1} parent=1 // loop_body
      %s26 = ssub.s32 %s21, 1
      %s27 = ssub.s32 %s21, 2
      %s34 = sadd.s32 1, %s29
      %p35 = scmp.ge.s32.totalorder %s34, 2
      %s36 = scalar_select %p35, 0, %s34
      %s37 = sadd.s32 1, %s28
      %s38 = scalar_select %p35, %s37, %s28
      %p39 = scmp.ge.s32.totalorder %s38, 2
      %s40 = scalar_select %p39, 0, %s38
      %s41 = ssub.s32 %s28, %s40
      %s42 = ssub.s32 %s29, %s36
      %s43 = sor.u32 %s41, %s42
      %p44 = scmp.eq.s32.totalorder %s43, 0
      %s46 = sadd.s32 %s45, 1
      %s47 = scalar_select %p44, %s45, %s46
      %p50 = pneg %p44
      %p51 = scmp.eq.s32.totalorder %s21, 3
      %p52 = por %p50, %p51
      %p53 = scmp.ne.s32.totalorder %s45, %s48
      %p54 = scmp.eq.s32.totalorder %s21, 0
      %p55 = por %p53, %p54
      %p56 = scmp.ne.s32.totalorder %s45, %s48
      %p57 = scmp.eq.s32.totalorder %s26, 3
      %p58 = por %p56, %p57
      %p59 = scmp.ne.s32.totalorder %s48, %s49
      %p60 = scmp.eq.s32.totalorder %s26, 0
      %p61 = por %p59, %p60
      %p62 = scmp.ne.s32.totalorder %s48, %s49
      %p63 = scmp.eq.s32.totalorder %s27, 3
      %p64 = por %p62, %p63
      %p66 = scmp.ne.s32.totalorder %s49, %s65
      %p67 = scmp.eq.s32.totalorder %s27, 0
      %p68 = por %p66, %p67
      %s70 = sadd.s32 %s69, 1
      %p73 = scmp.eq.s32.totalorder %s21, 3
      %p74 = scmp.ne.s32.totalorder %s69, %s71
      %p75 = scmp.eq.s32.totalorder %s21, 0
      %p76 = por %p74, %p75
      %p77 = scmp.ne.s32.totalorder %s69, %s71
      %p78 = scmp.eq.s32.totalorder %s26, 3
      %p79 = por %p77, %p78
      %p80 = scmp.ne.s32.totalorder %s71, %s72
      %p81 = scmp.eq.s32.totalorder %s26, 0
      %p82 = por %p80, %p81
      %p83 = scmp.ne.s32.totalorder %s71, %s72
      %p84 = scmp.eq.s32.totalorder %s27, 3
      %p85 = por %p83, %p84
      %p87 = scmp.ne.s32.totalorder %s72, %s86
      %p88 = scmp.eq.s32.totalorder %s27, 0
      %p89 = por %p87, %p88
      %s90 = ssub.s32 %s29, %s36
      %p91 = scmp.eq.s32.totalorder %s90, 0
      %s93 = sadd.s32 %s92, 1
      %s94 = scalar_select %p91, %s92, %s93
      %p97 = pneg %p91
      %p98 = scmp.eq.s32.totalorder %s21, 3
      %p99 = por %p97, %p98
      %p100 = scmp.ne.s32.totalorder %s92, %s95
      %p101 = scmp.eq.s32.totalorder %s21, 0
      %p102 = por %p100, %p101
      %p103 = scmp.ne.s32.totalorder %s92, %s95
      %p104 = scmp.eq.s32.totalorder %s26, 3
      %p105 = por %p103, %p104
      %p106 = scmp.ne.s32.totalorder %s95, %s96
      %p107 = scmp.eq.s32.totalorder %s26, 0
      %p108 = por %p106, %p107
      %p109 = scmp.ne.s32.totalorder %s95, %s96
      %p110 = scmp.eq.s32.totalorder %s27, 3
      %p111 = por %p109, %p110
      %p113 = scmp.ne.s32.totalorder %s96, %s112
      %p114 = scmp.eq.s32.totalorder %s27, 0
      %p115 = por %p113, %p114
      %s117 = sadd.s32 %s116, 1
      %p120 = scmp.eq.s32.totalorder %s21, 3
      %p121 = scmp.ne.s32.totalorder %s116, %s118
      %p122 = scmp.eq.s32.totalorder %s21, 0
      %p123 = por %p121, %p122
      %p124 = scmp.ne.s32.totalorder %s116, %s118
      %p125 = scmp.eq.s32.totalorder %s26, 3
      %p126 = por %p124, %p125
      %p127 = scmp.ne.s32.totalorder %s118, %s119
      %p128 = scmp.eq.s32.totalorder %s26, 0
      %p129 = por %p127, %p128
      %p130 = scmp.ne.s32.totalorder %s118, %s119
      %p131 = scmp.eq.s32.totalorder %s27, 3
      %p132 = por %p130, %p131
      %p134 = scmp.ne.s32.totalorder %s119, %s133
      %p135 = scmp.eq.s32.totalorder %s27, 0
      %p136 = por %p134, %p135
      %s138 = sadd.s32 %s137, 1
      %p141 = scmp.eq.s32.totalorder %s21, 3
      %p142 = scmp.ne.s32.totalorder %s137, %s139
      %p143 = scmp.eq.s32.totalorder %s21, 0
      %p144 = por %p142, %p143
      %p145 = scmp.ne.s32.totalorder %s137, %s139
      %p146 = scmp.eq.s32.totalorder %s26, 3
      %p147 = por %p145, %p146
      %p148 = scmp.ne.s32.totalorder %s139, %s140
      %p149 = scmp.eq.s32.totalorder %s26, 0
      %p150 = por %p148, %p149
      %p151 = scmp.ne.s32.totalorder %s139, %s140
      %p152 = scmp.eq.s32.totalorder %s27, 3
      %p153 = por %p151, %p152
      %p155 = scmp.ne.s32.totalorder %s140, %s154
      %p156 = scmp.eq.s32.totalorder %s27, 0
      %p157 = por %p155, %p156
      %s158 = ssub.s32 %s28, %s40
      %s159 = ssub.s32 %s29, %s36
      %s160 = sor.u32 %s158, %s159
      %p161 = scmp.eq.s32.totalorder %s160, 0
      %s163 = sadd.s32 %s162, 1
      %s164 = scalar_select %p161, %s162, %s163
      %p167 = pneg %p161
      %p168 = scmp.eq.s32.totalorder %s21, 3
      %p169 = por %p167, %p168
      %p170 = scmp.ne.s32.totalorder %s162, %s165
      %p171 = scmp.eq.s32.totalorder %s21, 0
      %p172 = por %p170, %p171
      %p173 = scmp.ne.s32.totalorder %s162, %s165
      %p174 = scmp.eq.s32.totalorder %s26, 3
      %p175 = por %p173, %p174
      %p176 = scmp.ne.s32.totalorder %s165, %s166
      %p177 = scmp.eq.s32.totalorder %s26, 0
      %p178 = por %p176, %p177
      %p179 = scmp.ne.s32.totalorder %s165, %s166
      %p180 = scmp.eq.s32.totalorder %s27, 3
      %p181 = por %p179, %p180
      %p183 = scmp.ne.s32.totalorder %s166, %s182
      %p184 = scmp.eq.s32.totalorder %s27, 0
      %p185 = por %p183, %p184
      %s186 = ssub.s32 %s28, %s40
      %s187 = ssub.s32 %s29, %s36
      %s188 = sor.u32 %s186, %s187
      %p189 = scmp.eq.s32.totalorder %s188, 0
      %s191 = sadd.s32 %s190, 1
      %s192 = scalar_select %p189, %s190, %s191
      %p195 = pneg %p189
      %p196 = scmp.eq.s32.totalorder %s21, 3
      %p197 = por %p195, %p196
      %p198 = scmp.ne.s32.totalorder %s190, %s193
      %p199 = scmp.eq.s32.totalorder %s21, 0
      %p200 = por %p198, %p199
      %p201 = scmp.ne.s32.totalorder %s190, %s193
      %p202 = scmp.eq.s32.totalorder %s26, 3
      %p203 = por %p201, %p202
      %p204 = scmp.ne.s32.totalorder %s193, %s194
      %p205 = scmp.eq.s32.totalorder %s26, 0
      %p206 = por %p204, %p205
      %p207 = scmp.ne.s32.totalorder %s193, %s194
      %p208 = scmp.eq.s32.totalorder %s27, 3
      %p209 = por %p207, %p208
      %p211 = scmp.ne.s32.totalorder %s194, %s210
      %p212 = scmp.eq.s32.totalorder %s27, 0
      %p213 = por %p211, %p212
      %s214 = ssub.s32 %s28, %s40
      %p215 = scmp.eq.s32.totalorder %s214, 0
      %s217 = sadd.s32 %s216, 1
      %s218 = scalar_select %p215, %s216, %s217
      %p221 = pneg %p215
      %p222 = scmp.eq.s32.totalorder %s21, 3
      %p223 = por %p221, %p222
      %p224 = scmp.ne.s32.totalorder %s216, %s219
      %p225 = scmp.eq.s32.totalorder %s21, 0
      %p226 = por %p224, %p225
      %p227 = scmp.ne.s32.totalorder %s216, %s219
      %p228 = scmp.eq.s32.totalorder %s26, 3
      %p229 = por %p227, %p228
      %p230 = scmp.ne.s32.totalorder %s219, %s220
      %p231 = scmp.eq.s32.totalorder %s26, 0
      %p232 = por %p230, %p231
      %p233 = scmp.ne.s32.totalorder %s219, %s220
      %p234 = scmp.eq.s32.totalorder %s27, 3
      %p235 = por %p233, %p234
      %p237 = scmp.ne.s32.totalorder %s220, %s236
      %p238 = scmp.eq.s32.totalorder %s27, 0
      %p239 = por %p237, %p238
      %s240 = ssub.s32 %s28, %s40
      %p241 = scmp.eq.s32.totalorder %s240, 0
      %s243 = sadd.s32 %s242, 1
      %s244 = scalar_select %p241, %s242, %s243
      %p247 = pneg %p241
      %p248 = scmp.eq.s32.totalorder %s21, 3
      %p249 = por %p247, %p248
      %p250 = scmp.ne.s32.totalorder %s242, %s245
      %p251 = scmp.eq.s32.totalorder %s21, 0
      %p252 = por %p250, %p251
      %p253 = scmp.ne.s32.totalorder %s242, %s245
      %p254 = scmp.eq.s32.totalorder %s26, 3
      %p255 = por %p253, %p254
      %p256 = scmp.ne.s32.totalorder %s245, %s246
      %p257 = scmp.eq.s32.totalorder %s26, 0
      %p258 = por %p256, %p257
      %p259 = scmp.ne.s32.totalorder %s245, %s246
      %p260 = scmp.eq.s32.totalorder %s27, 3
      %p261 = por %p259, %p260
      %p263 = scmp.ne.s32.totalorder %s246, %s262
      %p264 = scmp.eq.s32.totalorder %s27, 0
      %p265 = por %p263, %p264
      %p266 = scmp.le.s32.totalorder 1, %s21
      %p267 = scmp.lt.s32.totalorder %s21, 5
      %p268 = pnand %p266, %p267
      %p269 = pneg %p268
      // Predicated region
      $region9: #{tpu_custom_call.1} parent=5 // pred_check
        _
      $region10: #{tpu_custom_call.1} parent=5 // pred_check_branch
        %271 = sbr.rel (%p268) target = $region12
      $region11: #{tpu_custom_call.1} parent=5 // pred_region
        %s272 = ssub.s32 %s21, 1
        // Predicated region
        $region13: #{tpu_custom_call.1} parent=11 // pred_check
          %p273 = pneg %p82
        $region14: #{tpu_custom_call.1} parent=11 // pred_check_branch
          %275 = sbr.rel (%p273) target = $region16
        $region15: #{tpu_custom_call.1} parent=11 // pred_region
          _
        $region16: #{tpu_custom_call.1} parent=11 // pred_fallthru
          _
        // Predicated region
        $region17: #{tpu_custom_call.1} parent=11 // pred_check
          %p276 = pneg %p129
        $region18: #{tpu_custom_call.1} parent=11 // pred_check_branch
          %278 = sbr.rel (%p276) target = $region20
        $region19: #{tpu_custom_call.1} parent=11 // pred_region
          _
        $region20: #{tpu_custom_call.1} parent=11 // pred_fallthru
          _
        // Predicated region
        $region21: #{tpu_custom_call.1} parent=11 // pred_check
          %p279 = pneg %p150
        $region22: #{tpu_custom_call.1} parent=11 // pred_check_branch
          %281 = sbr.rel (%p279) target = $region24
        $region23: #{tpu_custom_call.1} parent=11 // pred_region
          _
        $region24: #{tpu_custom_call.1} parent=11 // pred_fallthru
          _
      $region12: #{tpu_custom_call.1} parent=5 // pred_fallthru
        _
      %p282 = scmp.lt.s32.totalorder %s21, 4
      // Predicated region
      $region25: #{tpu_custom_call.1} parent=5 // pred_check
        %p283 = pneg %p282
      $region26: #{tpu_custom_call.1} parent=5 // pred_check_branch
        %285 = sbr.rel (%p283) target = $region28
      $region27: #{tpu_custom_call.1} parent=5 // pred_region
        // Predicated region
        $region29: #{tpu_custom_call.1} parent=27 // pred_check
          %p286 = pneg %p55
        $region30: #{tpu_custom_call.1} parent=27 // pred_check_branch
          %288 = sbr.rel (%p286) target = $region32
        $region31: #{tpu_custom_call.1} parent=27 // pred_region
          %s289 = smul.u32 4, %s29
          %p290 = scmp.lt.s32.totalorder %s28, 1
          %s291 = scalar_select %p290, %s28, 1
          %p292 = scmp.lt.s32.totalorder %s289, 7
          %s293 = scalar_select %p292, %s289, 7
          %s294 = smul.addr %s291, 8
          %s295 = sadd.s32 %s293, %s294
          %s296 = smul.addr %s295, 8
          %s297 = scalar_lea.vmem %s0, %s296
          %s298 = smul.u32 4, %s29
        $region32: #{tpu_custom_call.1} parent=27 // pred_fallthru
          _
        // Predicated region
        $region33: #{tpu_custom_call.1} parent=27 // pred_check
          %p299 = pneg %p102
        $region34: #{tpu_custom_call.1} parent=27 // pred_check_branch
          %301 = sbr.rel (%p299) target = $region36
        $region35: #{tpu_custom_call.1} parent=27 // pred_region
          %s302 = smul.u32 4, %s29
          %p303 = scmp.lt.s32.totalorder %s302, 7
          %s304 = scalar_select %p303, %s302, 7
          %s305 = smul.addr %s304, 4
          %s306 = scalar_lea.vmem %s2, %s305
          %s307 = smul.u32 4, %s29
        $region36: #{tpu_custom_call.1} parent=27 // pred_fallthru
          _
      $region28: #{tpu_custom_call.1} parent=5 // pred_fallthru
        _
      %p308 = scmp.le.s32.totalorder 1, %s21
      %p309 = scmp.lt.s32.totalorder %s21, 5
      %p310 = pnand %p308, %p309
      %p311 = pneg %p310
      // Predicated region
      $region37: #{tpu_custom_call.1} parent=5 // pred_check
        _
      $region38: #{tpu_custom_call.1} parent=5 // pred_check_branch
        %313 = sbr.rel (%p310) target = $region40
      $region39: #{tpu_custom_call.1} parent=5 // pred_region
        %s314 = ssub.s32 %s21, 1
        %s315 = smul.u32 4, %s31
        %p316 = scmp.lt.s32.totalorder %s30, 1
        %s317 = scalar_select %p316, %s30, 1
        %p318 = scmp.lt.s32.totalorder %s315, 7
        %s319 = scalar_select %p318, %s315, 7
        %s320 = smul.addr %s317, 8
        %s321 = sadd.s32 %s319, %s320
        %s322 = smul.addr %s321, 8
        %s323 = scalar_lea.vmem %s0, %s322
        %p324 = pneg %p61
        %p325 = pneg %p58
        %p326 = pneg %p82
        %p327 = pneg %p79
        %s328 = smul.u32 4, %s31
        %p329 = scmp.lt.s32.totalorder %s328, 7
        %s330 = scalar_select %p329, %s328, 7
        %s331 = smul.addr %s330, 4
        %s332 = scalar_lea.vmem %s2, %s331
        %p333 = pneg %p108
        %p334 = pneg %p105
        %p335 = pneg %p129
        %p336 = pneg %p126
        %p337 = pneg %p150
        %p338 = pneg %p147
        %p339 = pneg %p178
        %p340 = pneg %p175
        %s341 = smul.u32 4, %s31
        %p342 = scmp.lt.s32.totalorder %s30, 1
        %s343 = scalar_select %p342, %s30, 1
        %p344 = scmp.lt.s32.totalorder %s341, 7
        %s345 = scalar_select %p344, %s341, 7
        %s346 = smul.addr %s343, 8
        %s347 = sadd.s32 %s345, %s346
        %s348 = smul.addr %s347, 4
        %s349 = scalar_lea.vmem %s5, %s348
        %p350 = pneg %p206
        %p351 = pneg %p203
        %s352 = smul.u32 4, %s31
        %p353 = scmp.lt.s32.totalorder %s30, 1
        %s354 = scalar_select %p353, %s30, 1
        %p355 = scmp.lt.s32.totalorder %s352, 7
        %s356 = scalar_select %p355, %s352, 7
        %s357 = smul.addr %s354, 8
        %s358 = sadd.s32 %s356, %s357
        %s359 = smul.addr %s358, 4
        %s360 = scalar_lea.vmem %s6, %s359
        %p361 = pneg %p232
        %p362 = pneg %p229
        %s363 = sand.u32 %s219, 1
        %s364 = scalar_lea.sflag [#allocation3], %s363
        %s365 = sand.u32 %s219, 1
        %s366 = smul.addr %s365, 32
        %s367 = scalar_lea.vmem [#allocation2], %s366
        %p368 = pneg %p258
        %p369 = pneg %p255
        %s370 = sand.u32 %s245, 1
        %s371 = scalar_lea.sflag [#allocation5], %s370
        %s372 = sand.u32 %s245, 1
        %s373 = scalar_lea.vmem [#allocation4], %s372
        %s374 = smul.u32 4, %s31
        %p375 = scmp.lt.s32.totalorder %s30, 1
        %s376 = scalar_select %p375, %s30, 1
        %p377 = scmp.lt.s32.totalorder %s374, 7
        %s378 = scalar_select %p377, %s374, 7
        %s379 = smul.addr %s376, 8
        %s380 = sadd.s32 %s378, %s379
        %s381 = smul.addr %s380, 8
        %s382 = scalar_lea.vmem %s0, %s381
        %s383 = smul.u32 4, %s31
        %s384 = smul.u32 4, %s31
        %p385 = scmp.lt.s32.totalorder %s384, 7
        %s386 = scalar_select %p385, %s384, 7
        %s387 = smul.addr %s386, 4
        %s388 = scalar_lea.vmem %s2, %s387
        %s389 = smul.u32 4, %s31
        %s390 = smul.u32 4, %s31
        %p391 = scmp.lt.s32.totalorder %s30, 1
        %s392 = scalar_select %p391, %s30, 1
        %p393 = scmp.lt.s32.totalorder %s390, 7
        %s394 = scalar_select %p393, %s390, 7
        %s395 = smul.addr %s392, 8
        %s396 = sadd.s32 %s394, %s395
        %s397 = smul.addr %s396, 4
        %s398 = scalar_lea.vmem %s5, %s397
        %s399 = smul.u32 4, %s31
        %s400 = smul.u32 4, %s31
        %p401 = scmp.lt.s32.totalorder %s30, 1
        %s402 = scalar_select %p401, %s30, 1
        %p403 = scmp.lt.s32.totalorder %s400, 7
        %s404 = scalar_select %p403, %s400, 7
        %s405 = smul.addr %s402, 8
        %s406 = sadd.s32 %s404, %s405
        %s407 = smul.addr %s406, 4
        %s408 = scalar_lea.vmem %s6, %s407
        %s409 = smul.u32 4, %s31
        %v411 = vld [vmem:[%s382] sm:$0xff]
        %v412 = vld [vmem:[%s382 + $0x8] sm:$0xff]
        %v413 = vld [vmem:[%s382 + $0x10] sm:$0xff]
        %v414 = vld [vmem:[%s382 + $0x18] sm:$0xff]
        %v415 = vpack.c.bf16 %v412, %v411
        %v416 = vpack.c.bf16 %v414, %v413
        %v417 = vld [vmem:[%s1] sm:$0xf]
        %v418 = vld [vmem:[%s1 + $0x4] sm:$0xf]
        %v419 = vld [vmem:[%s1 + $0x8] sm:$0xf]
        %v420 = vld [vmem:[%s1 + $0xc] sm:$0xf]
        %v425 = vunpack.c.l.b16 %v417
        %v426 = vunpack.c.l.b16 %v418
        %v427 = vunpack.c.l.b16 %v419
        %v428 = vunpack.c.l.b16 %v420
        %v429 = vpack.c.b16 %v426, %v425
        %v430 = vpack.c.b16 %v428, %v427
        %vm433 = vcmask 261120
        %v435 = vsel %vm433, %v415, 0
        %v438 = vsel %vm433, %v416, 0
        %440 = vmatprep.subr.bf16.mxu0 0
        %441 = vmatpush1.bf16.msra.mxu0 0
        %442 = vmatprep.subr.bf16.mxu0 0
        %443 = vmatpush1.bf16.msra.mxu0 0
        %444 = vmatprep.subr.bf16.mxu0 0
        %445 = vmatpush1.bf16.msra.mxu0 0
        %446 = vmatprep.subr.bf16.mxu0 0
        %447 = vmatpush1.bf16.msra.mxu0 0
        %448 = vmatprep.subr.bf16.mxu0 0
        %449 = vmatpush1.bf16.msra.mxu0 0
        %450 = vmatprep.subr.bf16.mxu0 0
        %451 = vmatpush1.bf16.msra.mxu0 0
        %452 = vmatprep.subr.bf16.mxu0 0
        %453 = vmatpush1.bf16.msra.mxu0 %v430
        %454 = vmatprep.subr.bf16.mxu0 0
        %455 = vmatpush1.bf16.msra.mxu0 %v429
        %456 = vmatprep.subr.bf16.mxu0 0
        %457 = vmatpush2.bf16.msra.mxu0 0
        %458 = vmatprep.subr.bf16.mxu0 0
        %459 = vmatpush2.bf16.msra.mxu0 0
        %460 = vmatprep.subr.bf16.mxu0 0
        %461 = vmatpush2.bf16.msra.mxu0 0
        %462 = vmatprep.subr.bf16.mxu0 0
        %463 = vmatpush2.bf16.msra.mxu0 0
        %464 = vmatprep.subr.bf16.mxu0 0
        %465 = vmatpush2.bf16.msra.mxu0 0
        %466 = vmatprep.subr.bf16.mxu0 0
        %467 = vmatpush2.bf16.msra.mxu0 0
        %468 = vmatprep.subr.bf16.mxu0 0
        %469 = vmatpush2.bf16.msra.mxu0 0
        %470 = vmatprep.subr.bf16.mxu0 0
        %471 = vmatpush2.bf16.msra.mxu0 0
        %472 = vmatprep.mubr.bf16.mxu0 0
        %473 = vmatmul.mubr.bf16.gmra.mxu0 %v435
        %v474 = vpop.f32.mrf.mxu0
        %v475 = vadd.f32 0.0, %v474
        %v476 = vpop.f32.mrf.mxu0
        %v477 = vpop.f32.mrf.mxu0
        %v478 = vadd.f32 0.0, %v477
        %v479 = vpop.f32.mrf.mxu0
        %480 = vmatprep.mubr.bf16.mxu0 0
        %481 = vmatmul.mubr.bf16.gmra.mxu0 %v438
        %v482 = vpop.f32.mrf.mxu0
        %v483 = vadd.f32 0.0, %v482
        %v484 = vpop.f32.mrf.mxu0
        %v485 = vpop.f32.mrf.mxu0
        %v486 = vadd.f32 0.0, %v485
        %v487 = vpop.f32.mrf.mxu0
        %488 = vdwg.mxu0
        %v489 = vld [vmem:[%s388] sm:$0xf]
        %v490 = vld [vmem:[%s388 + $0x4] sm:$0xf]
        %v491 = vld [vmem:[%s388 + $0x8] sm:$0xf]
        %v492 = vld [vmem:[%s388 + $0xc] sm:$0xf]
        %v493 = vunpack.c.l.bf16 %v489
        %v494 = vunpack.c.l.bf16 %v490
        %v495 = vunpack.c.l.bf16 %v491
        %v496 = vunpack.c.l.bf16 %v492
        %501 = vrot.lane.b32.xlu0 %v493, 32
        %v502 = vpop.permute.xlu0 %501
        %503 = vrot.lane.b32.xlu0 %v494, 32
        %v504 = vpop.permute.xlu0 %503
        %505 = vrot.lane.b32.xlu0 %v495, 32
        %v506 = vpop.permute.xlu0 %505
        %507 = vrot.lane.b32.xlu0 %v496, 32
        %v508 = vpop.permute.xlu0 %507
        %v513 = vadd.f32 %v475, %v502
        %v514 = vadd.f32 %v478, %v504
        %v515 = vadd.f32 %v483, %v506
        %v516 = vadd.f32 %v486, %v508
        %v517 = vld [vmem:[%s3] sm:$0x1]
        %v518 = vmax.f32 %v475, 0.0
        %v519 = vmax.f32 %v478, 0.0
        %v520 = vmax.f32 %v483, 0.0
        %v521 = vmax.f32 %v486, 0.0
        %v522 = vadd.f32 %v518, 1e-06
        %v523 = vadd.f32 %v519, 1e-06
        %v524 = vadd.f32 %v520, 1e-06
        %v525 = vadd.f32 %v521, 1e-06
        %v527 = vlaneseq
        %v528 = vshrl.u32 %v527, 7
        %v529 = vsub.s32 0, %v528
        %v530 = vrot.slane %v517, %v529
        %v532 = vmul.f32 %v522, %v530
        %v533 = vmul.f32 %v523, %v530
        %v534 = vmul.f32 %v524, %v530
        %v535 = vmul.f32 %v525, %v530
        %v536 = vmul.f32 %v532, %v532
        %v537 = vmul.f32 %v533, %v533
        %v538 = vmul.f32 %v534, %v534
        %v539 = vmul.f32 %v535, %v535
        %v540 = vsel %vm433, %v536, 0.0
        %541 = vadd.xlane.f32.xlu0 %v540
        %v542 = vpop.xlane.xlu0 %541
        %v543 = vsel %vm433, %v537, 0.0
        %544 = vadd.xlane.f32.xlu0 %v543
        %v545 = vpop.xlane.xlu0 %544
        %v546 = vsel %vm433, %v538, 0.0
        %547 = vadd.xlane.f32.xlu0 %v546
        %v548 = vpop.xlane.xlu0 %547
        %v549 = vsel %vm433, %v539, 0.0
        %550 = vadd.xlane.f32.xlu0 %v549
        %v551 = vpop.xlane.xlu0 %550
        %v552 = vmul.f32 %v536, %v532
        %v553 = vmul.f32 %v537, %v533
        %v554 = vmul.f32 %v538, %v534
        %v555 = vmul.f32 %v539, %v535
        %v556 = vmul.f32 %v552, %v552
        %v557 = vmul.f32 %v553, %v553
        %v558 = vmul.f32 %v554, %v554
        %v559 = vmul.f32 %v555, %v555
        %v560 = vsel %vm433, %v556, 0.0
        %561 = vadd.xlane.f32.xlu0 %v560
        %v562 = vpop.xlane.xlu0 %561
        %v563 = vsel %vm433, %v557, 0.0
        %564 = vadd.xlane.f32.xlu0 %v563
        %v565 = vpop.xlane.xlu0 %564
        %v566 = vsel %vm433, %v558, 0.0
        %567 = vadd.xlane.f32.xlu0 %v566
        %v568 = vpop.xlane.xlu0 %567
        %v569 = vsel %vm433, %v559, 0.0
        %570 = vadd.xlane.f32.xlu0 %v569
        %v571 = vpop.xlane.xlu0 %570
        %v572 = vrsqrt.pop %v542
        %v573 = vmul.f32 %v542, %v572
        %vm574 = vcmp.eq.f32.partialorder %v542, inf
        %v575 = vsel %vm574, %v542, %v573
        %vm576 = vcmp.eq.f32.partialorder %v542, 0.0
        %v577 = vand.u32 %v542, 2147483648
        %v578 = vsel %vm576, %v577, %v575
        %v579 = vrsqrt.pop %v545
        %v580 = vmul.f32 %v545, %v579
        %vm581 = vcmp.eq.f32.partialorder %v545, inf
        %v582 = vsel %vm581, %v545, %v580
        %vm583 = vcmp.eq.f32.partialorder %v545, 0.0
        %v584 = vand.u32 %v545, 2147483648
        %v585 = vsel %vm583, %v584, %v582
        %v586 = vrsqrt.pop %v548
        %v587 = vmul.f32 %v548, %v586
        %vm588 = vcmp.eq.f32.partialorder %v548, inf
        %v589 = vsel %vm588, %v548, %v587
        %vm590 = vcmp.eq.f32.partialorder %v548, 0.0
        %v591 = vand.u32 %v548, 2147483648
        %v592 = vsel %vm590, %v591, %v589
        %v593 = vrsqrt.pop %v551
        %v594 = vmul.f32 %v551, %v593
        %vm595 = vcmp.eq.f32.partialorder %v551, inf
        %v596 = vsel %vm595, %v551, %v594
        %vm597 = vcmp.eq.f32.partialorder %v551, 0.0
        %v598 = vand.u32 %v551, 2147483648
        %v599 = vsel %vm597, %v598, %v596
        %v600 = vrsqrt.pop %v562
        %v601 = vrsqrt.pop %v565
        %v602 = vrsqrt.pop %v568
        %v603 = vrsqrt.pop %v571
        %v604 = vmul.f32 %v578, %v600
        %v605 = vmul.f32 %v585, %v601
        %v606 = vmul.f32 %v592, %v602
        %v607 = vmul.f32 %v599, %v603
        %v608 = vmul.f32 %v552, %v604
        %v609 = vmul.f32 %v553, %v605
        %v610 = vmul.f32 %v554, %v606
        %v611 = vmul.f32 %v555, %v607
        %v612 = vmax.f32 %v513, 0.0
        %v613 = vmax.f32 %v514, 0.0
        %v614 = vmax.f32 %v515, 0.0
        %v615 = vmax.f32 %v516, 0.0
        %v616 = vadd.f32 %v612, 1e-06
        %v617 = vadd.f32 %v613, 1e-06
        %v618 = vadd.f32 %v614, 1e-06
        %v619 = vadd.f32 %v615, 1e-06
        %620 = vrot.lane.b32.xlu0 %v530, 32
        %v621 = vpop.permute.xlu0 %620
        %v623 = vmul.f32 %v616, %v621
        %v624 = vmul.f32 %v617, %v621
        %v625 = vmul.f32 %v618, %v621
        %v626 = vmul.f32 %v619, %v621
        %v627 = vmul.f32 %v623, %v623
        %v628 = vmul.f32 %v624, %v624
        %v629 = vmul.f32 %v625, %v625
        %v630 = vmul.f32 %v626, %v626
        %635 = vrot.lane.b32.xlu0 %v627, 96
        %v636 = vpop.permute.xlu0 %635
        %637 = vrot.lane.b32.xlu0 %v628, 96
        %v638 = vpop.permute.xlu0 %637
        %639 = vrot.lane.b32.xlu0 %v629, 96
        %v640 = vpop.permute.xlu0 %639
        %641 = vrot.lane.b32.xlu0 %v630, 96
        %v642 = vpop.permute.xlu0 %641
        %v647 = vsel %vm433, %v636, 0.0
        %648 = vadd.xlane.f32.xlu0 %v647
        %v649 = vpop.xlane.xlu0 %648
        %v650 = vsel %vm433, %v638, 0.0
        %651 = vadd.xlane.f32.xlu0 %v650
        %v652 = vpop.xlane.xlu0 %651
        %v653 = vsel %vm433, %v640, 0.0
        %654 = vadd.xlane.f32.xlu0 %v653
        %v655 = vpop.xlane.xlu0 %654
        %v656 = vsel %vm433, %v642, 0.0
        %657 = vadd.xlane.f32.xlu0 %v656
        %v658 = vpop.xlane.xlu0 %657
        %v659 = vmul.f32 %v627, %v623
        %v660 = vmul.f32 %v628, %v624
        %v661 = vmul.f32 %v629, %v625
        %v662 = vmul.f32 %v630, %v626
        %v663 = vmul.f32 %v659, %v659
        %v664 = vmul.f32 %v660, %v660
        %v665 = vmul.f32 %v661, %v661
        %v666 = vmul.f32 %v662, %v662
        %671 = vrot.lane.b32.xlu0 %v663, 96
        %v672 = vpop.permute.xlu0 %671
        %673 = vrot.lane.b32.xlu0 %v664, 96
        %v674 = vpop.permute.xlu0 %673
        %675 = vrot.lane.b32.xlu0 %v665, 96
        %v676 = vpop.permute.xlu0 %675
        %677 = vrot.lane.b32.xlu0 %v666, 96
        %v678 = vpop.permute.xlu0 %677
        %v683 = vsel %vm433, %v672, 0.0
        %684 = vadd.xlane.f32.xlu0 %v683
        %v685 = vpop.xlane.xlu0 %684
        %v686 = vsel %vm433, %v674, 0.0
        %687 = vadd.xlane.f32.xlu0 %v686
        %v688 = vpop.xlane.xlu0 %687
        %v689 = vsel %vm433, %v676, 0.0
        %690 = vadd.xlane.f32.xlu0 %v689
        %v691 = vpop.xlane.xlu0 %690
        %v692 = vsel %vm433, %v678, 0.0
        %693 = vadd.xlane.f32.xlu0 %v692
        %v694 = vpop.xlane.xlu0 %693
        %v695 = vrsqrt.pop %v649
        %v696 = vmul.f32 %v649, %v695
        %vm697 = vcmp.eq.f32.partialorder %v649, inf
        %v698 = vsel %vm697, %v649, %v696
        %vm699 = vcmp.eq.f32.partialorder %v649, 0.0
        %v700 = vand.u32 %v649, 2147483648
        %v701 = vsel %vm699, %v700, %v698
        %v702 = vrsqrt.pop %v652
        %v703 = vmul.f32 %v652, %v702
        %vm704 = vcmp.eq.f32.partialorder %v652, inf
        %v705 = vsel %vm704, %v652, %v703
        %vm706 = vcmp.eq.f32.partialorder %v652, 0.0
        %v707 = vand.u32 %v652, 2147483648
        %v708 = vsel %vm706, %v707, %v705
        %v709 = vrsqrt.pop %v655
        %v710 = vmul.f32 %v655, %v709
        %vm711 = vcmp.eq.f32.partialorder %v655, inf
        %v712 = vsel %vm711, %v655, %v710
        %vm713 = vcmp.eq.f32.partialorder %v655, 0.0
        %v714 = vand.u32 %v655, 2147483648
        %v715 = vsel %vm713, %v714, %v712
        %v716 = vrsqrt.pop %v658
        %v717 = vmul.f32 %v658, %v716
        %vm718 = vcmp.eq.f32.partialorder %v658, inf
        %v719 = vsel %vm718, %v658, %v717
        %vm720 = vcmp.eq.f32.partialorder %v658, 0.0
        %v721 = vand.u32 %v658, 2147483648
        %v722 = vsel %vm720, %v721, %v719
        %v723 = vrsqrt.pop %v685
        %v724 = vrsqrt.pop %v688
        %v725 = vrsqrt.pop %v691
        %v726 = vrsqrt.pop %v694
        %v727 = vmul.f32 %v701, %v723
        %v728 = vmul.f32 %v708, %v724
        %v729 = vmul.f32 %v715, %v725
        %v730 = vmul.f32 %v722, %v726
        %v731 = vmul.f32 %v659, %v727
        %v732 = vmul.f32 %v660, %v728
        %v733 = vmul.f32 %v661, %v729
        %v734 = vmul.f32 %v662, %v730
        %v735 = vpack.c.bf16 %v609, %v608
        %v736 = vpack.c.bf16 %v611, %v610
        %v739 = vunpack.c.l.b16 %v735
        %v740 = vunpack.c.h.b16 %v735
        %v741 = vunpack.c.l.b16 %v736
        %v742 = vunpack.c.h.b16 %v736
        %v743 = vpack.c.b16 %v739, %v739
        %v744 = vpack.c.b16 %v740, %v740
        %v745 = vpack.c.b16 %v741, %v741
        %v746 = vpack.c.b16 %v742, %v742
        %vm751 = vcmask 257024
        %752 = vst.msk [vmem:[%s398] sm:$0xf] %vm751, %v743
        %753 = vst.msk [vmem:[%s398 + $0x4] sm:$0xf] %vm751, %v744
        %754 = vst.msk [vmem:[%s398 + $0x8] sm:$0xf] %vm751, %v745
        %755 = vst.msk [vmem:[%s398 + $0xc] sm:$0xf] %vm751, %v746
        %v756 = vpack.c.bf16 %v478, %v475
        %v757 = vpack.c.bf16 %v486, %v483
        %v760 = vunpack.c.l.b16 %v756
        %v761 = vunpack.c.h.b16 %v756
        %v762 = vunpack.c.l.b16 %v757
        %v763 = vunpack.c.h.b16 %v757
        %v764 = vpack.c.b16 %v760, %v760
        %v765 = vpack.c.b16 %v761, %v761
        %v766 = vpack.c.b16 %v762, %v762
        %v767 = vpack.c.b16 %v763, %v763
        %768 = vrot.lane.b32.xlu0 %v764, 64
        %v769 = vpop.permute.xlu0 %768
        %770 = vrot.lane.b32.xlu0 %v765, 64
        %v771 = vpop.permute.xlu0 %770
        %772 = vrot.lane.b32.xlu0 %v766, 64
        %v773 = vpop.permute.xlu0 %772
        %774 = vrot.lane.b32.xlu0 %v767, 64
        %v775 = vpop.permute.xlu0 %774
        %780 = vst.msk [vmem:[%s408] sm:$0xf] %vm751, %v769
        %781 = vst.msk [vmem:[%s408 + $0x4] sm:$0xf] %vm751, %v771
        %782 = vst.msk [vmem:[%s408 + $0x8] sm:$0xf] %vm751, %v773
        %783 = vst.msk [vmem:[%s408 + $0xc] sm:$0xf] %vm751, %v775
        %p784 = scmp.eq.s32.totalorder %s31, 0
        // Predicated region
        $region41: #{tpu_custom_call.1} parent=39 // pred_check
          %p785 = pneg %p784
        $region42: #{tpu_custom_call.1} parent=39 // pred_check_branch
          %787 = sbr.rel (%p785) target = $region44
        $region43: #{tpu_custom_call.1} parent=39 // pred_region
          %788 = vst.msk [vmem:[%s367] sm:$0xff] %vm433, 0.0
          %789 = vst.msk [vmem:[%s367 + $0x8] sm:$0xff] %vm433, 0.0
          %790 = vst.msk [vmem:[%s367 + $0x10] sm:$0xff] %vm433, 0.0
          %791 = vst.msk [vmem:[%s367 + $0x18] sm:$0xff] %vm433, 0.0
          %vm792 = vcmask 253952
          %793 = vst.msk [vmem:[%s373] sm:$0x1] %vm792, 0.0
        $region44: #{tpu_custom_call.1} parent=39 // pred_fallthru
          _
        %v794 = vld [vmem:[%s367] sm:$0xff]
        %v795 = vld [vmem:[%s367 + $0x8] sm:$0xff]
        %v796 = vld [vmem:[%s367 + $0x10] sm:$0xff]
        %v797 = vld [vmem:[%s367 + $0x18] sm:$0xff]
        %v798 = vpack.c.bf16 %v732, %v731
        %v799 = vpack.c.bf16 %v734, %v733
        %802 = vrot.lane.b32.xlu0 %v798, 96
        %v803 = vpop.permute.xlu0 %802
        %804 = vrot.lane.b32.xlu0 %v799, 96
        %v805 = vpop.permute.xlu0 %804
        %808 = vxpose.xlu0.c.b16.start [1/8] %v803, 128
        %809 = vxpose.xlu0.c.b16.cont [2/8] %v805, 128
        %810 = vxpose.xlu0.c.b16.cont [3/8] 0, 128
        %811 = vxpose.xlu0.c.b16.cont [4/8] 0, 128
        %812 = vxpose.xlu0.c.b16.cont [5/8] 0, 128
        %813 = vxpose.xlu0.c.b16.cont [6/8] 0, 128
        %814 = vxpose.xlu0.c.b16.cont [7/8] 0, 128
        %815 = vxpose.xlu0.c.b16.end [8/8] 0, 128
        %v816 = vpop.trf.xlu0
        %v817 = vpop.trf.xlu0
        %v818 = vpop.trf.xlu0
        %v819 = vpop.trf.xlu0
        %v820 = vpop.trf.xlu0
        %v821 = vpop.trf.xlu0
        %v822 = vpop.trf.xlu0
        %v823 = vpop.trf.xlu0
        %824 = vrot.lane.b32.xlu0 %v756, 64
        %v825 = vpop.permute.xlu0 %824
        %826 = vrot.lane.b32.xlu0 %v757, 64
        %v827 = vpop.permute.xlu0 %826
        %v831 = vsel %vm433, %v816, 0
        %v834 = vsel %vm433, %v817, 0
        %836 = vmatprep.subr.bf16.mxu0 0
        %837 = vmatpush1.bf16.msra.mxu0 0
        %838 = vmatprep.subr.bf16.mxu0 0
        %839 = vmatpush1.bf16.msra.mxu0 0
        %840 = vmatprep.subr.bf16.mxu0 0
        %841 = vmatpush1.bf16.msra.mxu0 0
        %842 = vmatprep.subr.bf16.mxu0 0
        %843 = vmatpush1.bf16.msra.mxu0 0
        %844 = vmatprep.subr.bf16.mxu0 0
        %845 = vmatpush1.bf16.msra.mxu0 0
        %846 = vmatprep.subr.bf16.mxu0 0
        %847 = vmatpush1.bf16.msra.mxu0 0
        %848 = vmatprep.subr.bf16.mxu0 0
        %849 = vmatpush1.bf16.msra.mxu0 %v827
        %850 = vmatprep.subr.bf16.mxu0 0
        %851 = vmatpush1.bf16.msra.mxu0 %v825
        %852 = vmatprep.subr.bf16.mxu0 0
        %853 = vmatpush2.bf16.msra.mxu0 0
        %854 = vmatprep.subr.bf16.mxu0 0
        %855 = vmatpush2.bf16.msra.mxu0 0
        %856 = vmatprep.subr.bf16.mxu0 0
        %857 = vmatpush2.bf16.msra.mxu0 0
        %858 = vmatprep.subr.bf16.mxu0 0
        %859 = vmatpush2.bf16.msra.mxu0 0
        %860 = vmatprep.subr.bf16.mxu0 0
        %861 = vmatpush2.bf16.msra.mxu0 0
        %862 = vmatprep.subr.bf16.mxu0 0
        %863 = vmatpush2.bf16.msra.mxu0 0
        %864 = vmatprep.subr.bf16.mxu0 0
        %865 = vmatpush2.bf16.msra.mxu0 0
        %866 = vmatprep.subr.bf16.mxu0 0
        %867 = vmatpush2.bf16.msra.mxu0 0
        %868 = vmatprep.mubr.bf16.mxu0 0
        %869 = vmatmul.mubr.bf16.gmra.mxu0 %v831
        %v870 = vpop.f32.mrf.mxu0
        %v871 = vadd.f32 0.0, %v870
        %v872 = vpop.f32.mrf.mxu0
        %v873 = vpop.f32.mrf.mxu0
        %v874 = vadd.f32 0.0, %v873
        %v875 = vpop.f32.mrf.mxu0
        %876 = vmatprep.mubr.bf16.mxu0 0
        %877 = vmatmul.mubr.bf16.gmra.mxu0 %v834
        %v878 = vpop.f32.mrf.mxu0
        %v879 = vadd.f32 0.0, %v878
        %v880 = vpop.f32.mrf.mxu0
        %v881 = vpop.f32.mrf.mxu0
        %v882 = vadd.f32 0.0, %v881
        %v883 = vpop.f32.mrf.mxu0
        %884 = vdwg.mxu0
        %v885 = vadd.f32 %v794, %v871
        %v886 = vadd.f32 %v795, %v874
        %v887 = vadd.f32 %v796, %v879
        %v888 = vadd.f32 %v797, %v882
        %889 = vst.msk [vmem:[%s367] sm:$0xff] %vm433, %v885
        %890 = vst.msk [vmem:[%s367 + $0x8] sm:$0xff] %vm433, %v886
        %891 = vst.msk [vmem:[%s367 + $0x10] sm:$0xff] %vm433, %v887
        %892 = vst.msk [vmem:[%s367 + $0x18] sm:$0xff] %vm433, %v888
        %v893 = vld [vmem:[%s373] sm:$0x1]
        %vm894 = vcmask 523520
        %v895 = vsel %vm894, %v731, 0.0
        %v896 = vsel %vm894, %v732, 0.0
        %v897 = vadd.f32 %v895, %v896
        %v898 = vsel %vm894, %v733, 0.0
        %v899 = vadd.f32 %v897, %v898
        %v900 = vsel %vm894, %v734, 0.0
        %v901 = vadd.f32 %v899, %v900
        %v902 = vrot.slane %v901, 4
        %v903 = vadd.f32 %v901, %v902
        %v904 = vrot.slane %v903, 2
        %v905 = vadd.f32 %v903, %v904
        %v906 = vrot.slane %v905, 1
        %v907 = vadd.f32 %v905, %v906
        %v910 = vunpack.c.l.s4 1966171168
        %v911 = vunpack.c.0.s8 %v910
        %v912 = vlaneseq
        %v913 = vshrl.u32 %v912, 7
        %v914 = vsub.s32 %v911, %v913
        %v915 = vrot.slane %v907, %v914
        %v917 = vunpack.c.l.s4 1966171168
        %v918 = vunpack.c.0.s8 %v917
        %v919 = vlaneseq
        %v920 = vshrl.u32 %v919, 7
        %v921 = vsub.s32 %v918, %v920
        %v922 = vrot.slane %v915, %v921
        %923 = vrot.lane.b32.xlu0 %v922, 96
        %v924 = vpop.permute.xlu0 %923
        %v926 = vadd.f32 %v893, %v924
        %vm927 = vcmask 253952
        %928 = vst.msk [vmem:[%s373] sm:$0x1] %vm927, %v926
        %p929 = scmp.eq.s32.totalorder %s31, 1
        // Predicated region
        $region45: #{tpu_custom_call.1} parent=39 // pred_check
          %p930 = pneg %p929
        $region46: #{tpu_custom_call.1} parent=39 // pred_check_branch
          %932 = sbr.rel (%p930) target = $region48
        $region47: #{tpu_custom_call.1} parent=39 // pred_region
          %v933 = vld [vmem:[%s367] sm:$0xff]
          %v934 = vld [vmem:[%s367 + $0x8] sm:$0xff]
          %v935 = vld [vmem:[%s367 + $0x10] sm:$0xff]
          %v936 = vld [vmem:[%s367 + $0x18] sm:$0xff]
          %v937 = vld [vmem:[%s4] sm:$0xff]
          %v938 = vld [vmem:[%s4 + $0x8] sm:$0xff]
          %v939 = vld [vmem:[%s4 + $0x10] sm:$0xff]
          %v940 = vld [vmem:[%s4 + $0x18] sm:$0xff]
          %v941 = vmul.f32 %v933, %v937
          %v942 = vmul.f32 %v934, %v938
          %v943 = vmul.f32 %v935, %v939
          %v944 = vmul.f32 %v936, %v940
          %945 = vst.msk [vmem:[%s367] sm:$0xff] %vm433, %v941
          %946 = vst.msk [vmem:[%s367 + $0x8] sm:$0xff] %vm433, %v942
          %947 = vst.msk [vmem:[%s367 + $0x10] sm:$0xff] %vm433, %v943
          %948 = vst.msk [vmem:[%s367 + $0x18] sm:$0xff] %vm433, %v944
          %v949 = vld [vmem:[%s373] sm:$0x1]
          %v950 = vmul.f32 %v949, 0.015625
          %951 = vst.msk [vmem:[%s373] sm:$0x1] %vm927, %v950
        $region48: #{tpu_custom_call.1} parent=39 // pred_fallthru
          _
        %s952 = smul.u32 4, %s31
        %p953 = scmp.lt.s32.totalorder %s30, 1
        %s954 = scalar_select %p953, %s30, 1
        %p955 = scmp.lt.s32.totalorder %s952, 7
        %s956 = scalar_select %p955, %s952, 7
        %s957 = smul.addr %s954, 8
        %s958 = sadd.s32 %s956, %s957
        %s959 = smul.addr %s958, 4
        %s960 = scalar_lea.vmem %s5, %s959
        %s961 = smul.u32 4, %s31
        %p962 = scmp.lt.s32.totalorder %s30, 1
        %s963 = scalar_select %p962, %s30, 1
        %p964 = scmp.lt.s32.totalorder %s961, 7
        %s965 = scalar_select %p964, %s961, 7
        %s966 = smul.addr %s963, 8
        %s967 = sadd.s32 %s965, %s966
        %s968 = smul.addr %s967, 4
        %s969 = scalar_lea.vmem %s6, %s968
        %s970 = sand.u32 %s219, 1
        %s971 = scalar_lea.sflag [#allocation3], %s970
        %s972 = sand.u32 %s219, 1
        %s973 = smul.addr %s972, 32
        %s974 = scalar_lea.vmem [#allocation2], %s973
        %s975 = sand.u32 %s245, 1
        %s976 = scalar_lea.sflag [#allocation5], %s975
        %s977 = sand.u32 %s245, 1
        %s978 = scalar_lea.vmem [#allocation4], %s977
        // Predicated region
        $region49: #{tpu_custom_call.1} parent=39 // pred_check
          %p979 = pneg %p175
        $region50: #{tpu_custom_call.1} parent=39 // pred_check_branch
          %981 = sbr.rel (%p979) target = $region52
        $region51: #{tpu_custom_call.1} parent=39 // pred_region
          %s982 = smul.u32 4, %s31
        $region52: #{tpu_custom_call.1} parent=39 // pred_fallthru
          _
        // Predicated region
        $region53: #{tpu_custom_call.1} parent=39 // pred_check
          %p983 = pneg %p203
        $region54: #{tpu_custom_call.1} parent=39 // pred_check_branch
          %985 = sbr.rel (%p983) target = $region56
        $region55: #{tpu_custom_call.1} parent=39 // pred_region
          %s986 = smul.u32 4, %s31
        $region56: #{tpu_custom_call.1} parent=39 // pred_fallthru
          _
        // Predicated region
        $region57: #{tpu_custom_call.1} parent=39 // pred_check
          %p987 = pneg %p229
        $region58: #{tpu_custom_call.1} parent=39 // pred_check_branch
          %989 = sbr.rel (%p987) target = $region60
        $region59: #{tpu_custom_call.1} parent=39 // pred_region
          %s991 = ssub.s32 512, 512
          %992 = vsyncadd %s971, %s991
          %s993 = smul.addr %s30, 4
          %s994 = smul.addr %s993, 128
          %s995 = scalar_lea.hbm %s7, %s994
          %s996 = sshll.u32 %s974, 4
          %s997 = int_to_ptr.vmem [resolvable:$true] %s996
          %1002 = dma.vmem_to_hbm [thread:$0]  %s997, 512, %s995, %s971, 128, 128, 8
        $region60: #{tpu_custom_call.1} parent=39 // pred_fallthru
          _
        // Predicated region
        $region61: #{tpu_custom_call.1} parent=39 // pred_check
          %p1003 = pneg %p255
        $region62: #{tpu_custom_call.1} parent=39 // pred_check_branch
          %1005 = sbr.rel (%p1003) target = $region64
        $region63: #{tpu_custom_call.1} parent=39 // pred_region
          %s1007 = ssub.s32 16, 16
          %1008 = vsyncadd %s976, %s1007
          %s1009 = smul.addr %s30, 16
          %s1010 = scalar_lea.hbm %s8, %s1009
          %s1012 = sshll.u32 %s978, 4
          %s1013 = int_to_ptr.vmem [resolvable:$true] %s1012
          %1015 = dma.vmem_to_hbm [thread:$0]  %s1013, 16, %s1010, %s976
        $region64: #{tpu_custom_call.1} parent=39 // pred_fallthru
          _
      $region40: #{tpu_custom_call.1} parent=5 // pred_fallthru
        _
      %p1016 = scmp.le.s32.totalorder 2, %s21
      // Predicated region
      $region65: #{tpu_custom_call.1} parent=5 // pred_check
        %p1017 = pneg %p1016
      $region66: #{tpu_custom_call.1} parent=5 // pred_check_branch
        %1019 = sbr.rel (%p1017) target = $region68
      $region67: #{tpu_custom_call.1} parent=5 // pred_region
        %s1020 = ssub.s32 %s21, 2
        // Predicated region
        $region69: #{tpu_custom_call.1} parent=67 // pred_check
          %p1021 = pneg %p181
        $region70: #{tpu_custom_call.1} parent=67 // pred_check_branch
          %1023 = sbr.rel (%p1021) target = $region72
        $region71: #{tpu_custom_call.1} parent=67 // pred_region
          %s1024 = smul.u32 4, %s33
          %p1025 = scmp.lt.s32.totalorder %s32, 1
          %s1026 = scalar_select %p1025, %s32, 1
          %p1027 = scmp.lt.s32.totalorder %s1024, 7
          %s1028 = scalar_select %p1027, %s1024, 7
          %s1029 = smul.addr %s1026, 8
          %s1030 = sadd.s32 %s1028, %s1029
          %s1031 = smul.addr %s1030, 4
          %s1032 = scalar_lea.vmem %s5, %s1031
        $region72: #{tpu_custom_call.1} parent=67 // pred_fallthru
          _
        // Predicated region
        $region73: #{tpu_custom_call.1} parent=67 // pred_check
          %p1033 = pneg %p209
        $region74: #{tpu_custom_call.1} parent=67 // pred_check_branch
          %1035 = sbr.rel (%p1033) target = $region76
        $region75: #{tpu_custom_call.1} parent=67 // pred_region
          %s1036 = smul.u32 4, %s33
          %p1037 = scmp.lt.s32.totalorder %s32, 1
          %s1038 = scalar_select %p1037, %s32, 1
          %p1039 = scmp.lt.s32.totalorder %s1036, 7
          %s1040 = scalar_select %p1039, %s1036, 7
          %s1041 = smul.addr %s1038, 8
          %s1042 = sadd.s32 %s1040, %s1041
          %s1043 = smul.addr %s1042, 4
          %s1044 = scalar_lea.vmem %s6, %s1043
        $region76: #{tpu_custom_call.1} parent=67 // pred_fallthru
          _
        // Predicated region
        $region77: #{tpu_custom_call.1} parent=67 // pred_check
          %p1045 = pneg %p235
        $region78: #{tpu_custom_call.1} parent=67 // pred_check_branch
          %1047 = sbr.rel (%p1045) target = $region80
        $region79: #{tpu_custom_call.1} parent=67 // pred_region
          %s1048 = sand.u32 %s220, 1
          %s1049 = scalar_lea.sflag [#allocation3], %s1048
          %s1050 = sand.u32 %s220, 1
          %s1051 = smul.addr %s1050, 32
          %s1052 = scalar_lea.vmem [#allocation2], %s1051
          %1053 = dma.done %s1049, 512
        $region80: #{tpu_custom_call.1} parent=67 // pred_fallthru
          _
        // Predicated region
        $region81: #{tpu_custom_call.1} parent=67 // pred_check
          %p1054 = pneg %p261
        $region82: #{tpu_custom_call.1} parent=67 // pred_check_branch
          %1056 = sbr.rel (%p1054) target = $region84
        $region83: #{tpu_custom_call.1} parent=67 // pred_region
          %s1057 = sand.u32 %s246, 1
          %s1058 = scalar_lea.sflag [#allocation5], %s1057
          %s1059 = sand.u32 %s246, 1
          %s1060 = scalar_lea.vmem [#allocation4], %s1059
          %1061 = dma.done %s1058, 16
        $region84: #{tpu_custom_call.1} parent=67 // pred_fallthru
          _
      $region68: #{tpu_custom_call.1} parent=5 // pred_fallthru
        _
    $region6: #{tpu_custom_call.1} parent=1 // loop_footer
      %s25 = sadd.s32 1, %s21
    $region7: #{tpu_custom_call.1} parent=1 // loop_footer_branch
      %20 = sbr.rel target = $region3
    $region8: #{tpu_custom_call.1} parent=1 // loop_exit
      _
    %1062 = vsyncpa [#allocation3], 1
    %s1063 = scalar_lea.sflag [#allocation3], 1
    %1064 = vsyncpa %s1063, 1
    %1065 = vsyncpa [#allocation5], 1
    %s1066 = scalar_lea.sflag [#allocation5], 1
    %1067 = vsyncpa %s1066, 1

</llo_original>
